<compile_context>
chip_gen: v6e
topology: v6e:2x2x1
jax: 0.10.0
libtpu: 0.0.40
codegen_flags: <defaults>
</compile_context>

<pallas_src>
import jax
import jax.numpy as jnp
from jax.experimental import pallas as pl
from jax.experimental.pallas import tpu as pltpu

_LANE = 128
_SUBLANE = 8
_TARGET_BLOCK_BYTES = 8 * 1024 * 1024   # per-block target for the tiled path
_SMALL_BYTES = 1 * 1024 * 1024          # below this: launch-overhead-bound -> plain jnp
_SPLIT_BYTES = 512 * 1024               # above this: force >=2 blocks (v7x 2-TC balance)


def _cdiv(a, b):
    return -(-a // b)


def _round_up(a, m):
    return _cdiv(a, m) * m


def _relu_kernel(x_ref, o_ref):
    # Pure element-wise max-with-zero on the whole VMEM tile (VPU op).
    o_ref[...] = jnp.maximum(x_ref[...], jnp.zeros((), x_ref.dtype))


def _choose_tiling(rows, cols, elem_bytes):
    """Pick (block_rows, num_blocks) for a (rows, cols=128) lane-dense slab."""
    # Dtype-aware sublane pack: 8 rows f32, 16 bf16/f16, 32 int8/fp8.
    sub = _SUBLANE * max(1, 4 // elem_bytes)
    row_bytes = cols * elem_bytes
    target_rows = max(sub, (_TARGET_BLOCK_BYTES // row_bytes) // sub * sub)
    total_bytes = rows * row_bytes

    if rows <= target_rows:
        if total_bytes >= _SPLIT_BYTES and rows >= 2 * sub:
            # Medium tensor: >=2 blocks so v7x's two TensorCores both work
            # (no effect on single-TC v5e/v6e).
            block_rows = _round_up(_cdiv(rows, 2), sub)
        else:
            # Small tensor: single full-array block (block == full dims, so the
            # (8,128) divisibility rule is satisfied by the full-dims exception).
            return rows, 1
    else:
        nblocks = _cdiv(rows, target_rows)
        if nblocks % 2:
            nblocks += 1  # even block count balances v7x's two TCs
        block_rows = max(sub, _round_up(_cdiv(rows, nblocks), sub))

    return block_rows, _cdiv(rows, block_rows)


def _relu_impl(x, *, force_pallas=False):
    orig_shape = x.shape
    dtype = x.dtype
    total = x.size
    elem_bytes = jnp.dtype(dtype).itemsize

    if total == 0:
        return x

    # Tiny activations: a standalone pallas_call is pure launch overhead
    # (HBM traffic ~0.2-0.4 us vs several us of dispatch). Let XLA fuse a
    # plain max into neighboring ops instead.
    if not force_pallas and total * elem_bytes < _SMALL_BYTES:
        return jnp.maximum(x, jnp.zeros((), dtype))

    # Lane-dense slab: flatten, pad to a multiple of 128 if needed, reshape to
    # (rows, 128) so every store is an unmasked full-width vst.
    flat = x.reshape(-1)
    padded = _round_up(total, _LANE)
    if padded != total:
        flat = jnp.pad(flat, (0, padded - total))
    rows = padded // _LANE
    x2d = flat.reshape(rows, _LANE)

    block_rows, num_blocks = _choose_tiling(rows, _LANE, elem_bytes)
    block_bytes = block_rows * _LANE * elem_bytes
    # in + out, each double-buffered, plus headroom; clamp under v7x's 64 MiB VMEM.
    vmem_limit = int(min(60 * 1024 * 1024, max(32 * 1024 * 1024, 5 * block_bytes)))

    out2d = pl.pallas_call(
        _relu_kernel,
        out_shape=jax.ShapeDtypeStruct((rows, _LANE), dtype),
        grid_spec=pltpu.PrefetchScalarGridSpec(
            num_scalar_prefetch=0,
            grid=(num_blocks,),
            in_specs=[pl.BlockSpec((block_rows, _LANE), lambda i: (i, 0))],
            out_specs=pl.BlockSpec((block_rows, _LANE), lambda i: (i, 0)),
        ),
        compiler_params=pltpu.CompilerParams(
            dimension_semantics=("parallel",),
            vmem_limit_bytes=vmem_limit,
        ),
        cost_estimate=pl.CostEstimate(
            flops=padded,
            transcendentals=0,
            bytes_accessed=2 * padded * elem_bytes,
        ),
        # Mirror PyTorch's in-place ReLU: output reuses the input buffer
        # (effective because the wrapper is jitted with donate_argnums=0).
        input_output_aliases={0: 0},
    )(x2d)

    out = out2d.reshape(-1)
    if padded != total:
        out = out[:total]
    return out.reshape(orig_shape)


# Donate the input so the alias is realized (matches nn.ReLU(inplace=True)).
relu = jax.jit(_relu_impl, static_argnames=("force_pallas",), donate_argnums=0)


if __name__ == "__main__":
    key = jax.random.PRNGKey(0)
    # Matches the module's forward input: x383 ~ randn([1, 192, 14, 14])
    x = jax.random.normal(key, (1, 192, 14, 14), dtype=jnp.float32)

    # Reference computed before any (donating) call.
    y_ref = jnp.maximum(x, 0.0)

    # 1) Exercise the actual Pallas kernel. The input is donated, so pass a
    #    fresh buffer rather than x itself.
    y = relu(x + 0.0, force_pallas=True)
    jax.block_until_ready(y)
    assert y.shape == x.shape and y.dtype == x.dtype
    assert jnp.allclose(y, y_ref), "pallas ReLU mismatch vs reference"

    # 2) Default dispatch: this 147 KiB activation short-circuits to fused jnp.
    y2 = relu(x + 0.0)
    jax.block_until_ready(y2)
    assert jnp.allclose(y2, y_ref), "small-path ReLU mismatch vs reference"

    print("KERNEL_OK")
</pallas_src>

<mosaic_0001>
module attributes {stable_mosaic.version = 11 : i64} {
  func.func @_relu_kernel(%arg0: i32, %arg1: memref<294x128xf32, #tpu.memory_space<vmem>>, %arg2: memref<294x128xf32, #tpu.memory_space<vmem>>) attributes {dimension_semantics = [#tpu.dimension_semantics<parallel>], iteration_bounds = array<i64: 1>, scalar_prefetch = 0 : i64, scratch_operands = 0 : i64, tpu.core_type = #tpu.core_type<tc>, window_params = [{transform_indices = @transform_0, window_bounds = array<i64: 294, 128>}, {transform_indices = @transform_1, window_bounds = array<i64: 294, 128>}]} {
    %c0 = arith.constant 0 : index
    %c0_0 = arith.constant 0 : index
    %0 = vector.load %arg1[%c0, %c0_0] : memref<294x128xf32, #tpu.memory_space<vmem>>, vector<294x128xf32>
    %cst = arith.constant 0.000000e+00 : f32
    %1 = vector.broadcast %cst : f32 to vector<294x128xf32>
    %2 = arith.maximumf %0, %1 : vector<294x128xf32>
    %c0_1 = arith.constant 0 : index
    %c0_2 = arith.constant 0 : index
    %3 = vector.load %arg2[%c0_1, %c0_2] : memref<294x128xf32, #tpu.memory_space<vmem>>, vector<294x128xf32>
    tpu.vector_store %arg2[%c0_1, %c0_2], %2 {strides = array<i32>} : memref<294x128xf32, #tpu.memory_space<vmem>>, vector<294x128xf32>,
    return
  }
  func.func @transform_0(%arg0: i32) -> (i32, i32) {
    %c0_i32 = arith.constant 0 : i32
    %c0_i32_0 = arith.constant 0 : i32
    return %arg0, %c0_i32 : i32, i32
  }
  func.func @transform_1(%arg0: i32) -> (i32, i32) {
    %c0_i32 = arith.constant 0 : i32
    %c0_i32_0 = arith.constant 0 : i32
    return %arg0, %c0_i32 : i32, i32
  }
}

</mosaic_0001>

<llo_original>
// kernel: _relu_impl.1
$region0: #{_relu_impl.1}
  #allocation0 [shape = 'u32[]', space=smem, size = 0x4, offset = 0x4, fixed_abs, tag = 'smem constant byte address 0x4 - core index']
  #allocation1 [shape = 'u32[144,128]{1,0:T(1,128)}', space=vmem, size = 0x12000, scoped, tag = 'internal scratch']
  %s0 = inlined_call_operand.vmem [shape: f32[294,128], index: 0, kind: input, shape index: {}, may-alias: {0,1}]
  %s1 = inlined_call_operand.vmem [shape: f32[294,128], index: 1, kind: output, shape index: {}, may-alias: {0,1}]
  %s2 = sld [smem:[#allocation0]]
  $region14: #{_relu_impl.1} parent=0
    _
  %s4 = ssub.s32 1, %s2
  %s5 = scalar_select 0, %s4, %s2
  // Predicated region
  $region2: #{_relu_impl.1} parent=0 // pred_check
    _
  $region3: #{_relu_impl.1} parent=0 // pred_check_branch
    %7 = sbr.rel (0) target = $region5
  $region4: #{_relu_impl.1} parent=0 // pred_region
    _
  $region5: #{_relu_impl.1} parent=0 // pred_fallthru
    _
  %v8 = vld [vmem:[%s0] sm:$0xff]
  %v9 = vld [vmem:[%s0 + $0x8] sm:$0xff]
  %v10 = vld [vmem:[%s0 + $0x10] sm:$0xff]
  %v11 = vld [vmem:[%s0 + $0x18] sm:$0xff]
  %v12 = vld [vmem:[%s0 + $0x20] sm:$0xff]
  %v13 = vld [vmem:[%s0 + $0x28] sm:$0xff]
  %v14 = vld [vmem:[%s0 + $0x30] sm:$0xff]
  %v15 = vld [vmem:[%s0 + $0x38] sm:$0xff]
  %v16 = vld [vmem:[%s0 + $0x40] sm:$0xff]
  %v17 = vld [vmem:[%s0 + $0x48] sm:$0xff]
  %v18 = vld [vmem:[%s0 + $0x50] sm:$0xff]
  %v19 = vld [vmem:[%s0 + $0x58] sm:$0xff]
  %v20 = vld [vmem:[%s0 + $0x60] sm:$0xff]
  %v21 = vld [vmem:[%s0 + $0x68] sm:$0xff]
  %v22 = vld [vmem:[%s0 + $0x70] sm:$0xff]
  %v23 = vld [vmem:[%s0 + $0x78] sm:$0xff]
  %v24 = vld [vmem:[%s0 + $0x80] sm:$0xff]
  %v25 = vld [vmem:[%s0 + $0x88] sm:$0xff]
  %v26 = vld [vmem:[%s0 + $0x90] sm:$0xff]
  %v27 = vld [vmem:[%s0 + $0x98] sm:$0xff]
  %v28 = vld [vmem:[%s0 + $0xa0] sm:$0xff]
  %v29 = vld [vmem:[%s0 + $0xa8] sm:$0xff]
  %v30 = vld [vmem:[%s0 + $0xb0] sm:$0xff]
  %v31 = vld [vmem:[%s0 + $0xb8] sm:$0xff]
  %v32 = vld [vmem:[%s0 + $0xc0] sm:$0xff]
  %v33 = vld [vmem:[%s0 + $0xc8] sm:$0xff]
  %v34 = vld [vmem:[%s0 + $0xd0] sm:$0xff]
  %v35 = vld [vmem:[%s0 + $0xd8] sm:$0xff]
  %v36 = vld [vmem:[%s0 + $0xe0] sm:$0xff]
  %v37 = vld [vmem:[%s0 + $0xe8] sm:$0xff]
  %v38 = vld [vmem:[%s0 + $0xf0] sm:$0xff]
  %v39 = vld [vmem:[%s0 + $0xf8] sm:$0xff]
  %v40 = vld [vmem:[%s0 + $0x100] sm:$0xff]
  %v41 = vld [vmem:[%s0 + $0x108] sm:$0xff]
  %v42 = vld [vmem:[%s0 + $0x110] sm:$0xff]
  %v43 = vld [vmem:[%s0 + $0x118] sm:$0xff]
  %v44 = vld [vmem:[%s0 + $0x120] sm:$0x3f]
  %v45 = vmax.f32 %v8, 0.0
  %v46 = vmax.f32 %v9, 0.0
  %v47 = vmax.f32 %v10, 0.0
  %v48 = vmax.f32 %v11, 0.0
  %v49 = vmax.f32 %v12, 0.0
  %v50 = vmax.f32 %v13, 0.0
  %v51 = vmax.f32 %v14, 0.0
  %v52 = vmax.f32 %v15, 0.0
  %v53 = vmax.f32 %v16, 0.0
  %v54 = vmax.f32 %v17, 0.0
  %v55 = vmax.f32 %v18, 0.0
  %v56 = vmax.f32 %v19, 0.0
  %v57 = vmax.f32 %v20, 0.0
  %v58 = vmax.f32 %v21, 0.0
  %v59 = vmax.f32 %v22, 0.0
  %v60 = vmax.f32 %v23, 0.0
  %v61 = vmax.f32 %v24, 0.0
  %v62 = vmax.f32 %v25, 0.0
  %v63 = vmax.f32 %v26, 0.0
  %v64 = vmax.f32 %v27, 0.0
  %v65 = vmax.f32 %v28, 0.0
  %v66 = vmax.f32 %v29, 0.0
  %v67 = vmax.f32 %v30, 0.0
  %v68 = vmax.f32 %v31, 0.0
  %v69 = vmax.f32 %v32, 0.0
  %v70 = vmax.f32 %v33, 0.0
  %v71 = vmax.f32 %v34, 0.0
  %v72 = vmax.f32 %v35, 0.0
  %v73 = vmax.f32 %v36, 0.0
  %v74 = vmax.f32 %v37, 0.0
  %v75 = vmax.f32 %v38, 0.0
  %v76 = vmax.f32 %v39, 0.0
  %v77 = vmax.f32 %v40, 0.0
  %v78 = vmax.f32 %v41, 0.0
  %v79 = vmax.f32 %v42, 0.0
  %v80 = vmax.f32 %v43, 0.0
  %v81 = vmax.f32 %v44, 0.0
  %82 = vst [vmem:[%s1] sm:$0xff] %v45
  %83 = vst [vmem:[%s1 + $0x8] sm:$0xff] %v46
  %84 = vst [vmem:[%s1 + $0x10] sm:$0xff] %v47
  %85 = vst [vmem:[%s1 + $0x18] sm:$0xff] %v48
  %86 = vst [vmem:[%s1 + $0x20] sm:$0xff] %v49
  %87 = vst [vmem:[%s1 + $0x28] sm:$0xff] %v50
  %88 = vst [vmem:[%s1 + $0x30] sm:$0xff] %v51
  %89 = vst [vmem:[%s1 + $0x38] sm:$0xff] %v52
  %90 = vst [vmem:[%s1 + $0x40] sm:$0xff] %v53
  %91 = vst [vmem:[%s1 + $0x48] sm:$0xff] %v54
  %92 = vst [vmem:[%s1 + $0x50] sm:$0xff] %v55
  %93 = vst [vmem:[%s1 + $0x58] sm:$0xff] %v56
  %94 = vst [vmem:[%s1 + $0x60] sm:$0xff] %v57
  %95 = vst [vmem:[%s1 + $0x68] sm:$0xff] %v58
  %96 = vst [vmem:[%s1 + $0x70] sm:$0xff] %v59
  %97 = vst [vmem:[%s1 + $0x78] sm:$0xff] %v60
  %98 = vst [vmem:[%s1 + $0x80] sm:$0xff] %v61
  %99 = vst [vmem:[%s1 + $0x88] sm:$0xff] %v62
  %100 = vst [vmem:[%s1 + $0x90] sm:$0xff] %v63
  %101 = vst [vmem:[%s1 + $0x98] sm:$0xff] %v64
  %102 = vst [vmem:[%s1 + $0xa0] sm:$0xff] %v65
  %103 = vst [vmem:[%s1 + $0xa8] sm:$0xff] %v66
  %104 = vst [vmem:[%s1 + $0xb0] sm:$0xff] %v67
  %105 = vst [vmem:[%s1 + $0xb8] sm:$0xff] %v68
  %106 = vst [vmem:[%s1 + $0xc0] sm:$0xff] %v69
  %107 = vst [vmem:[%s1 + $0xc8] sm:$0xff] %v70
  %108 = vst [vmem:[%s1 + $0xd0] sm:$0xff] %v71
  %109 = vst [vmem:[%s1 + $0xd8] sm:$0xff] %v72
  %110 = vst [vmem:[%s1 + $0xe0] sm:$0xff] %v73
  %111 = vst [vmem:[%s1 + $0xe8] sm:$0xff] %v74
  %112 = vst [vmem:[%s1 + $0xf0] sm:$0xff] %v75
  %113 = vst [vmem:[%s1 + $0xf8] sm:$0xff] %v76
  %114 = vst [vmem:[%s1 + $0x100] sm:$0xff] %v77
  %115 = vst [vmem:[%s1 + $0x108] sm:$0xff] %v78
  %116 = vst [vmem:[%s1 + $0x110] sm:$0xff] %v79
  %117 = vst [vmem:[%s1 + $0x118] sm:$0xff] %v80
  %118 = vst [vmem:[%s1 + $0x120] sm:$0x3f] %v81
  // Predicated region
  $region6: #{_relu_impl.1} parent=0 // pred_check
    _
  $region7: #{_relu_impl.1} parent=0 // pred_check_branch
    %120 = sbr.rel (0) target = $region9
  $region8: #{_relu_impl.1} parent=0 // pred_region
    _
  $region9: #{_relu_impl.1} parent=0 // pred_fallthru
    _
  // Predicated region
  $region10: #{_relu_impl.1} parent=0 // pred_check
    _
  $region11: #{_relu_impl.1} parent=0 // pred_check_branch
    %122 = sbr.rel (0) target = $region13
  $region12: #{_relu_impl.1} parent=0 // pred_region
    _
  $region13: #{_relu_impl.1} parent=0 // pred_fallthru
    _

</llo_original>
